<compile_context>
chip_gen: v5e
topology: v5e:2x2
jax: 0.10.0
libtpu: 0.0.40
codegen_flags: <defaults>
</compile_context>

<pallas_src>
import math
from functools import partial
from typing import List

import jax
import jax.numpy as jnp
from jax.experimental import pallas as pl
from jax.experimental.pallas import tpu as pltpu

_LANE = 128      # lane width (last dim)
_SUBLANE = 8     # fp32 sublane count (second-to-last dim)


def _round_up(n: int, m: int) -> int:
    return ((n + m - 1) // m) * m


def _vmem_budget_bytes() -> int:
    """Per-core VMEM budget: ~85% of physical capacity, with a safe fallback."""
    try:
        cap = int(pltpu.get_tpu_info().vmem_capacity_bytes)
    except Exception:
        cap = 64 * 1024 * 1024   # conservative: valid on v5e/v6e/v7x
    return int(cap * 0.85)


# --------------------------------------------------------------------------
# One-time parameter preparation (outside jit): pad to lane multiples + cast.
# --------------------------------------------------------------------------
def prepare_mlp_params(params, compute_dtype=jnp.bfloat16):
    """Pad every weight to [128k, 128m] and cast to `compute_dtype`; biases stay fp32.

    Zero padding keeps the math exact (pad bias = 0, relu(0) = 0). Do this ONCE
    at init time, not inside the jitted forward.
    """
    prepared = []
    for (w, b) in params:
        din, dout = w.shape
        din_p, dout_p = _round_up(din, _LANE), _round_up(dout, _LANE)
        w_p = (jnp.zeros((din_p, dout_p), compute_dtype)
               .at[:din, :dout].set(w.astype(compute_dtype)))
        b_p = (jnp.zeros((1, dout_p), jnp.float32)
               .at[0, :dout].set(b.astype(jnp.float32)))
        prepared.append((w_p, b_p))
    return tuple(prepared)


# --------------------------------------------------------------------------
# Fused path: whole MLP in one kernel, weights VMEM-resident, batch tiled.
# --------------------------------------------------------------------------
def _fused_mlp_kernel(x_ref, *refs, n_layers: int):
    """refs = (w0, b0, w1, b1, ..., w_{L-1}, b_{L-1}, o_ref)."""
    o_ref = refs[-1]
    wb = refs[:-1]
    h = x_ref[...]                                     # [tm, din0_p] fp32
    for i in range(n_layers):
        w = wb[2 * i][...]                             # [din_p, dout_p] compute dtype
        b = wb[2 * i + 1][...]                         # [1, dout_p] fp32
        y = jnp.dot(h.astype(w.dtype), w,
                    preferred_element_type=jnp.float32) + b
        if i != n_layers - 1:
            y = jnp.maximum(y, 0.0)                    # fused ReLU; Dropout = identity (eval)
        h = y
    o_ref[...] = h.astype(o_ref.dtype)


def _fused_vmem_estimate(tm: int, din0_p: int, padded_params) -> int:
    w_bytes = sum(int(w.size) * w.dtype.itemsize + int(b.size) * 4
                  for (w, b) in padded_params)         # Buffered(1): single copy
    dims_p = [din0_p] + [w.shape[1] for (w, _) in padded_params]
    io = 2 * tm * (dims_p[0] + dims_p[-1]) * 4         # double-buffered x / out tiles
    act = 4 * tm * max(dims_p) * 4                     # live activations headroom
    return w_bytes + io + act + (4 << 20)              # + Mosaic internal scratch slack


def _fused_forward(x_p, padded_params, tm: int, vmem_limit: int):
    Bp, din0_p = x_p.shape
    n_layers = len(padded_params)
    dout_last_p = padded_params[-1][0].shape[1]

    args = [x_p]
    in_specs = [pl.BlockSpec((tm, din0_p), lambda i: (i, 0))]
    for (w_p, b_p) in padded_params:
        args += [w_p, b_p]
        # Constant index_map -> block never changes; single buffer is enough.
        in_specs += [
            pl.BlockSpec(w_p.shape, lambda i: (0, 0), pipeline_mode=pl.Buffered(1)),
            pl.BlockSpec(b_p.shape, lambda i: (0, 0), pipeline_mode=pl.Buffered(1)),
        ]

    return pl.pallas_call(
        partial(_fused_mlp_kernel, n_layers=n_layers),
        out_shape=jax.ShapeDtypeStruct((Bp, dout_last_p), x_p.dtype),
        grid=(Bp // tm,),
        in_specs=in_specs,
        out_specs=pl.BlockSpec((tm, dout_last_p), lambda i: (i, 0)),
        compiler_params=pltpu.CompilerParams(
            dimension_semantics=("parallel",),
            vmem_limit_bytes=vmem_limit,
        ),
    )(*args)


# --------------------------------------------------------------------------
# Fallback path: per-layer K/N-tiled matmul (bias + ReLU fused in finalize).
# Used when the all-weights-resident fused layout would not fit in VMEM.
# --------------------------------------------------------------------------
def _linear_kernel(x_ref, w_ref, b_ref, o_ref, acc_ref, *, apply_relu: bool):
    k = pl.program_id(2)

    @pl.when(k == 0)
    def _():
        acc_ref[...] = jnp.zeros_like(acc_ref)

    acc_ref[...] += jnp.dot(x_ref[...].astype(w_ref.dtype), w_ref[...],
                            preferred_element_type=jnp.float32)

    @pl.when(k == pl.num_programs(2) - 1)
    def _():
        y = acc_ref[...] + b_ref[...]
        if apply_relu:
            y = jnp.maximum(y, 0.0)
        o_ref[...] = y.astype(o_ref.dtype)


def _linear_pallas(x_p, w_p, b_p, *, apply_relu: bool, vmem_limit: int):
    Mp, Kp = x_p.shape
    Np = w_p.shape[1]
    # Tile sizes: multiples of (8, 128) that divide the padded dims exactly.
    tm = math.gcd(Mp, 256)
    tn = math.gcd(Np, 256)
    tk = math.gcd(Kp, 512)
    grid = (Mp // tm, Np // tn, Kp // tk)
    return pl.pallas_call(
        partial(_linear_kernel, apply_relu=apply_relu),
        out_shape=jax.ShapeDtypeStruct((Mp, Np), x_p.dtype),
        grid=grid,
        in_specs=[
            pl.BlockSpec((tm, tk), lambda i, j, k: (i, k)),
            pl.BlockSpec((tk, tn), lambda i, j, k: (k, j)),
            pl.BlockSpec((1, tn), lambda i, j, k: (0, j)),
        ],
        out_specs=pl.BlockSpec((tm, tn), lambda i, j, k: (i, j)),
        scratch_shapes=[pltpu.VMEM((tm, tn), jnp.float32)],
        compiler_params=pltpu.CompilerParams(
            dimension_semantics=("parallel", "parallel", "arbitrary"),
            vmem_limit_bytes=vmem_limit,
        ),
    )(x_p, w_p, b_p)


# --------------------------------------------------------------------------
# Public forward.
# --------------------------------------------------------------------------
def mlp_forward(x, padded_params, *, out_dim: int, block_m: int = 256,
                force_per_layer: bool = False):
    """x: [B, ...] -> flatten -> fused Pallas MLP. `padded_params` from prepare_mlp_params.

    `out_dim` (static) is the true last-layer width; padding is sliced off.
    """
    B = x.shape[0]
    x_flat = x.reshape(B, -1)                           # x.view(x.size(0), -1)
    Din = x_flat.shape[1]
    din0_p = padded_params[0][0].shape[0]

    # Batch tile: multiple of 8, no larger than the (padded) batch.
    Bp_min = _round_up(max(B, _SUBLANE), _SUBLANE)
    tm = min(_round_up(block_m, _SUBLANE), Bp_min)

    budget = _vmem_budget_bytes()

    use_fused = not force_per_layer
    if use_fused:
        # Shrink the batch tile until the weights-resident layout fits on-chip.
        while tm > _SUBLANE and _fused_vmem_estimate(tm, din0_p, padded_params) > budget:
            tm = max(_SUBLANE, _round_up(tm // 2, _SUBLANE))
        use_fused = _fused_vmem_estimate(tm, din0_p, padded_params) <= budget

    Bp = _round_up(Bp_min, tm)
    x_p = jnp.zeros((Bp, din0_p), x_flat.dtype).at[:B, :Din].set(x_flat)

    if use_fused:
        out_p = _fused_forward(x_p, padded_params, tm, budget)
    else:
        # Weights too large to keep resident: stream each layer through a
        # K/N-tiled Pallas matmul instead (bounded VMEM, still MXU-bound).
        h = x_p
        n_layers = len(padded_params)
        for li, (w_p, b_p) in enumerate(padded_params):
            h = _linear_pallas(h, w_p, b_p,
                               apply_relu=(li != n_layers - 1),
                               vmem_limit=budget)
        out_p = h

    return out_p[:B, :out_dim]


def init_mlp_params(key, layer_sizes: List[int]):
    """Deterministic init mirroring nn.Linear shapes (stored transposed: [in, out])."""
    params = []
    for i in range(len(layer_sizes) - 1):
        key, kw, kb = jax.random.split(key, 3)
        fan_in = layer_sizes[i]
        bound = 1.0 / jnp.sqrt(fan_in)
        w = jax.random.uniform(kw, (layer_sizes[i], layer_sizes[i + 1]),
                               minval=-bound, maxval=bound, dtype=jnp.float32)
        b = jax.random.uniform(kb, (layer_sizes[i + 1],),
                               minval=-bound, maxval=bound, dtype=jnp.float32)
        params.append((w, b))
    return params


if __name__ == "__main__":
    key = jax.random.PRNGKey(0)
    kx, kp = jax.random.split(key)

    # Small shapes: batch=2, channels=4, spatial=16 -> flattened dim 1024.
    B, C, H, W = 2, 4, 16, 16
    x = jax.random.normal(kx, (B, C, H, W), dtype=jnp.float32)

    layer_sizes = [C * H * W, 32, 32, 10]
    params = init_mlp_params(kp, layer_sizes)

    # Pure-JAX reference (same semantics as the nn.Module in eval mode).
    h_ref = x.reshape(B, -1)
    for i, (w, b) in enumerate(params):
        h_ref = h_ref @ w + b
        if i != len(params) - 1:
            h_ref = jnp.maximum(h_ref, 0.0)

    # Pad/cast parameters ONCE, outside the jitted forward.
    params_f32 = prepare_mlp_params(params, compute_dtype=jnp.float32)
    params_bf16 = prepare_mlp_params(params, compute_dtype=jnp.bfloat16)   # default perf path

    fwd = jax.jit(mlp_forward,
                  static_argnames=("out_dim", "block_m", "force_per_layer"))

    # fp32 path (matches PyTorch numerics).
    out_f32 = jax.block_until_ready(fwd(x, params_f32, out_dim=layer_sizes[-1]))
    assert out_f32.shape == (B, layer_sizes[-1])
    assert jnp.allclose(out_f32, h_ref, atol=1e-4, rtol=1e-4), \
        float(jnp.max(jnp.abs(out_f32 - h_ref)))

    # bf16 MXU path (fp32 accumulation) — default perf configuration.
    out_bf16 = jax.block_until_ready(fwd(x, params_bf16, out_dim=layer_sizes[-1]))
    assert out_bf16.shape == (B, layer_sizes[-1])
    assert bool(jnp.all(jnp.isfinite(out_bf16)))
    assert jnp.allclose(out_bf16, h_ref, atol=5e-2, rtol=5e-2), \
        float(jnp.max(jnp.abs(out_bf16 - h_ref)))

    # Exercise the per-layer streaming fallback (used automatically when the
    # fused weights-resident layout would exceed the per-core VMEM budget).
    out_fb = jax.block_until_ready(
        fwd(x, params_f32, out_dim=layer_sizes[-1], force_per_layer=True))
    assert jnp.allclose(out_fb, h_ref, atol=1e-4, rtol=1e-4), \
        float(jnp.max(jnp.abs(out_fb - h_ref)))

    print("KERNEL_OK")
</pallas_src>

<mosaic_0001>
module attributes {stable_mosaic.version = 11 : i64} {
  func.func @_fused_mlp_kernel(%arg0: i32, %arg1: memref<8x1024xf32, #tpu.memory_space<vmem>>, %arg2: memref<1024x128xf32, #tpu.memory_space<vmem>>, %arg3: memref<1x128xf32, #tpu.memory_space<vmem>>, %arg4: memref<128x128xf32, #tpu.memory_space<vmem>>, %arg5: memref<1x128xf32, #tpu.memory_space<vmem>>, %arg6: memref<128x128xf32, #tpu.memory_space<vmem>>, %arg7: memref<1x128xf32, #tpu.memory_space<vmem>>, %arg8: memref<8x128xf32, #tpu.memory_space<vmem>>) attributes {dimension_semantics = [#tpu.dimension_semantics<parallel>], iteration_bounds = array<i64: 1>, scalar_prefetch = 0 : i64, scratch_operands = 0 : i64, tpu.core_type = #tpu.core_type<tc>, window_params = [{transform_indices = @transform_0, window_bounds = array<i64: 8, 1024>}, {pipeline_mode = #tpu.pipeline_mode<synchronous>, transform_indices = @transform_1, window_bounds = array<i64: 1024, 128>}, {pipeline_mode = #tpu.pipeline_mode<synchronous>, transform_indices = @transform_2, window_bounds = array<i64: 1, 128>}, {pipeline_mode = #tpu.pipeline_mode<synchronous>, transform_indices = @transform_3, window_bounds = array<i64: 128, 128>}, {pipeline_mode = #tpu.pipeline_mode<synchronous>, transform_indices = @transform_4, window_bounds = array<i64: 1, 128>}, {pipeline_mode = #tpu.pipeline_mode<synchronous>, transform_indices = @transform_5, window_bounds = array<i64: 128, 128>}, {pipeline_mode = #tpu.pipeline_mode<synchronous>, transform_indices = @transform_6, window_bounds = array<i64: 1, 128>}, {transform_indices = @transform_7, window_bounds = array<i64: 8, 128>}]} {
    %c0 = arith.constant 0 : index
    %c0_0 = arith.constant 0 : index
    %0 = vector.load %arg1[%c0, %c0_0] : memref<8x1024xf32, #tpu.memory_space<vmem>>, vector<8x1024xf32>
    %c0_1 = arith.constant 0 : index
    %c0_2 = arith.constant 0 : index
    %1 = vector.load %arg2[%c0_1, %c0_2] : memref<1024x128xf32, #tpu.memory_space<vmem>>, vector<1024x128xf32>
    %c0_3 = arith.constant 0 : index
    %c0_4 = arith.constant 0 : index
    %2 = vector.load %arg3[%c0_3, %c0_4] : memref<1x128xf32, #tpu.memory_space<vmem>>, vector<1x128xf32>
    %cst = arith.constant dense<0.000000e+00> : vector<8x128xf32>
    %3 = tpu.matmul %0, %1, %cst {dimension_numbers = #tpu.dot_dimension_numbers<[1], [0], [0], [1], [0, 0, 1, 1], [], []>} : vector<8x1024xf32>, vector<1024x128xf32>, vector<8x128xf32> -> vector<8x128xf32>
    %4 = vector.broadcast %2 : vector<1x128xf32> to vector<8x128xf32>
    %5 = arith.addf %3, %4 : vector<8x128xf32>
    %cst_5 = arith.constant 0.000000e+00 : f32
    %6 = vector.broadcast %cst_5 : f32 to vector<8x128xf32>
    %7 = arith.maximumf %5, %6 : vector<8x128xf32>
    %c0_6 = arith.constant 0 : index
    %c0_7 = arith.constant 0 : index
    %8 = vector.load %arg4[%c0_6, %c0_7] : memref<128x128xf32, #tpu.memory_space<vmem>>, vector<128x128xf32>
    %c0_8 = arith.constant 0 : index
    %c0_9 = arith.constant 0 : index
    %9 = vector.load %arg5[%c0_8, %c0_9] : memref<1x128xf32, #tpu.memory_space<vmem>>, vector<1x128xf32>
    %cst_10 = arith.constant dense<0.000000e+00> : vector<8x128xf32>
    %10 = tpu.matmul %7, %8, %cst_10 {dimension_numbers = #tpu.dot_dimension_numbers<[1], [0], [0], [1], [0, 0, 1, 1], [], []>} : vector<8x128xf32>, vector<128x128xf32>, vector<8x128xf32> -> vector<8x128xf32>
    %11 = vector.broadcast %9 : vector<1x128xf32> to vector<8x128xf32>
    %12 = arith.addf %10, %11 : vector<8x128xf32>
    %cst_11 = arith.constant 0.000000e+00 : f32
    %13 = vector.broadcast %cst_11 : f32 to vector<8x128xf32>
    %14 = arith.maximumf %12, %13 : vector<8x128xf32>
    %c0_12 = arith.constant 0 : index
    %c0_13 = arith.constant 0 : index
    %15 = vector.load %arg6[%c0_12, %c0_13] : memref<128x128xf32, #tpu.memory_space<vmem>>, vector<128x128xf32>
    %c0_14 = arith.constant 0 : index
    %c0_15 = arith.constant 0 : index
    %16 = vector.load %arg7[%c0_14, %c0_15] : memref<1x128xf32, #tpu.memory_space<vmem>>, vector<1x128xf32>
    %cst_16 = arith.constant dense<0.000000e+00> : vector<8x128xf32>
    %17 = tpu.matmul %14, %15, %cst_16 {dimension_numbers = #tpu.dot_dimension_numbers<[1], [0], [0], [1], [0, 0, 1, 1], [], []>} : vector<8x128xf32>, vector<128x128xf32>, vector<8x128xf32> -> vector<8x128xf32>
    %18 = vector.broadcast %16 : vector<1x128xf32> to vector<8x128xf32>
    %19 = arith.addf %17, %18 : vector<8x128xf32>
    %c0_17 = arith.constant 0 : index
    %c0_18 = arith.constant 0 : index
    %20 = vector.load %arg8[%c0_17, %c0_18] : memref<8x128xf32, #tpu.memory_space<vmem>>, vector<8x128xf32>
    tpu.vector_store %arg8[%c0_17, %c0_18], %19 {strides = array<i32>} : memref<8x128xf32, #tpu.memory_space<vmem>>, vector<8x128xf32>,
    return
  }
  func.func @transform_0(%arg0: i32) -> (i32, i32) {
    %c0_i32 = arith.constant 0 : i32
    %c0_i32_0 = arith.constant 0 : i32
    return %arg0, %c0_i32 : i32, i32
  }
  func.func @transform_1(%arg0: i32) -> (i32, i32) {
    %c0_i32 = arith.constant 0 : i32
    %c0_i32_0 = arith.constant 0 : i32
    %c0_i32_1 = arith.constant 0 : i32
    return %c0_i32, %c0_i32_0 : i32, i32
  }
  func.func @transform_2(%arg0: i32) -> (i32, i32) {
    %c0_i32 = arith.constant 0 : i32
    %c0_i32_0 = arith.constant 0 : i32
    %c0_i32_1 = arith.constant 0 : i32
    return %c0_i32, %c0_i32_0 : i32, i32
  }
  func.func @transform_3(%arg0: i32) -> (i32, i32) {
    %c0_i32 = arith.constant 0 : i32
    %c0_i32_0 = arith.constant 0 : i32
    %c0_i32_1 = arith.constant 0 : i32
    return %c0_i32, %c0_i32_0 : i32, i32
  }
  func.func @transform_4(%arg0: i32) -> (i32, i32) {
    %c0_i32 = arith.constant 0 : i32
    %c0_i32_0 = arith.constant 0 : i32
    %c0_i32_1 = arith.constant 0 : i32
    return %c0_i32, %c0_i32_0 : i32, i32
  }
  func.func @transform_5(%arg0: i32) -> (i32, i32) {
    %c0_i32 = arith.constant 0 : i32
    %c0_i32_0 = arith.constant 0 : i32
    %c0_i32_1 = arith.constant 0 : i32
    return %c0_i32, %c0_i32_0 : i32, i32
  }
  func.func @transform_6(%arg0: i32) -> (i32, i32) {
    %c0_i32 = arith.constant 0 : i32
    %c0_i32_0 = arith.constant 0 : i32
    %c0_i32_1 = arith.constant 0 : i32
    return %c0_i32, %c0_i32_0 : i32, i32
  }
  func.func @transform_7(%arg0: i32) -> (i32, i32) {
    %c0_i32 = arith.constant 0 : i32
    %c0_i32_0 = arith.constant 0 : i32
    return %arg0, %c0_i32 : i32, i32
  }
}

</mosaic_0001>

<llo_original>
// kernel: mlp_forward.1
$region0: #{mlp_forward.1}
  #allocation0 [shape = 'u32[]', space=smem, size = 0x4, offset = 0x4, fixed_abs, tag = 'smem constant byte address 0x4 - core index']
  #allocation1 [shape = 'u32[72,128]{1,0:T(1,128)}', space=vmem, size = 0x9000, scoped, tag = 'internal scratch']
  %s0 = inlined_call_operand.vmem [shape: f32[8,1024], index: 0, kind: input, shape index: {}]
  %s1 = inlined_call_operand.hbm [shape: f32[1024,128], index: 1, kind: input, shape index: {}]
  %s2 = inlined_call_operand.vmem [shape: f32[1,128], index: 2, kind: input, shape index: {}]
  %s3 = inlined_call_operand.vmem [shape: f32[128,128], index: 3, kind: input, shape index: {}]
  %s4 = inlined_call_operand.vmem [shape: f32[1,128], index: 4, kind: input, shape index: {}]
  %s5 = inlined_call_operand.hbm [shape: f32[128,128], index: 5, kind: input, shape index: {}]
  %s6 = inlined_call_operand.vmem [shape: f32[1,128], index: 6, kind: input, shape index: {}]
  %s7 = inlined_call_operand.vmem [shape: f32[8,128], index: 7, kind: output, shape index: {}]
  %s8 = sld [smem:[#allocation0]]
  $region46: #{mlp_forward.1} parent=0
    _
  %s10 = ssub.s32 1, %s8
  %s11 = scalar_select 0, %s10, %s8
  $region1: #{mlp_forward.1} parent=0
    #allocation2 [shape = 'u8[524288]{0}', space=vmem, size = 0x80000, scoped, tag = 'input window, operand 1, single buffered']
    #allocation3 [shape = 's32[1]{0}', space=sflag, size = 0x4, scoped, tag = 'scoped memory for mlp_forward.1']
    #allocation4 [shape = 'u8[65536]{0}', space=vmem, size = 0x10000, scoped, tag = 'input window, operand 5, single buffered']
    #allocation5 [shape = 's32[1]{0}', space=sflag, size = 0x4, scoped, tag = 'scoped memory for mlp_forward.1']
    %12 = vsyncpa [#allocation3], 0
    %13 = vsyncpa [#allocation5], 0
    // Predicated region
    $region2: #{mlp_forward.1} parent=1 // pred_check
      _
    $region3: #{mlp_forward.1} parent=1 // pred_check_branch
      %15 = sbr.rel (0) target = $region5
    $region4: #{mlp_forward.1} parent=1 // pred_region
      _
    $region5: #{mlp_forward.1} parent=1 // pred_fallthru
      _
    // Predicated region
    $region6: #{mlp_forward.1} parent=1 // pred_check
      _
    $region7: #{mlp_forward.1} parent=1 // pred_check_branch
      %17 = sbr.rel (0) target = $region9
    $region8: #{mlp_forward.1} parent=1 // pred_region
      %19 = vsyncadd [#allocation3], 0
      %s20 = sshll.u32 %s1, 4
      %s21 = int_to_ptr.hbm [resolvable:$true] %s20
      %s22 = sshll.u32 [#allocation2], 4
      %s23 = int_to_ptr.vmem [resolvable:$true] %s22
      %28 = dma.hbm_to_vmem [thread:$0]  %s21, 16384, %s23, [#allocation3], 128, 128, 8
    $region9: #{mlp_forward.1} parent=1 // pred_fallthru
      _
    // Predicated region
    $region10: #{mlp_forward.1} parent=1 // pred_check
      _
    $region11: #{mlp_forward.1} parent=1 // pred_check_branch
      %30 = sbr.rel (0) target = $region13
    $region12: #{mlp_forward.1} parent=1 // pred_region
      _
    $region13: #{mlp_forward.1} parent=1 // pred_fallthru
      _
    // Predicated region
    $region14: #{mlp_forward.1} parent=1 // pred_check
      _
    $region15: #{mlp_forward.1} parent=1 // pred_check_branch
      %32 = sbr.rel (0) target = $region17
    $region16: #{mlp_forward.1} parent=1 // pred_region
      _
    $region17: #{mlp_forward.1} parent=1 // pred_fallthru
      _
    // Predicated region
    $region18: #{mlp_forward.1} parent=1 // pred_check
      _
    $region19: #{mlp_forward.1} parent=1 // pred_check_branch
      %34 = sbr.rel (0) target = $region21
    $region20: #{mlp_forward.1} parent=1 // pred_region
      _
    $region21: #{mlp_forward.1} parent=1 // pred_fallthru
      _
    // Predicated region
    $region22: #{mlp_forward.1} parent=1 // pred_check
      _
    $region23: #{mlp_forward.1} parent=1 // pred_check_branch
      %36 = sbr.rel (0) target = $region25
    $region24: #{mlp_forward.1} parent=1 // pred_region
      %38 = vsyncadd [#allocation5], 0
      %s39 = sshll.u32 %s5, 4
      %s40 = int_to_ptr.hbm [resolvable:$true] %s39
      %s41 = sshll.u32 [#allocation4], 4
      %s42 = int_to_ptr.vmem [resolvable:$true] %s41
      %47 = dma.hbm_to_vmem [thread:$0]  %s40, 2048, %s42, [#allocation5], 128, 128, 8
    $region25: #{mlp_forward.1} parent=1 // pred_fallthru
      _
    // Predicated region
    $region26: #{mlp_forward.1} parent=1 // pred_check
      _
    $region27: #{mlp_forward.1} parent=1 // pred_check_branch
      %49 = sbr.rel (0) target = $region29
    $region28: #{mlp_forward.1} parent=1 // pred_region
      _
    $region29: #{mlp_forward.1} parent=1 // pred_fallthru
      _
    // Predicated region
    $region30: #{mlp_forward.1} parent=1 // pred_check
      _
    $region31: #{mlp_forward.1} parent=1 // pred_check_branch
      %51 = sbr.rel (0) target = $region33
    $region32: #{mlp_forward.1} parent=1 // pred_region
      %53 = dma.done [#allocation3], 16384
    $region33: #{mlp_forward.1} parent=1 // pred_fallthru
      _
    // Predicated region
    $region34: #{mlp_forward.1} parent=1 // pred_check
      _
    $region35: #{mlp_forward.1} parent=1 // pred_check_branch
      %55 = sbr.rel (0) target = $region37
    $region36: #{mlp_forward.1} parent=1 // pred_region
      %57 = dma.done [#allocation5], 2048
    $region37: #{mlp_forward.1} parent=1 // pred_fallthru
      _
    %v58 = vld [vmem:[%s0] sm:$0xff]
    %v59 = vld [vmem:[%s0 + $0x8] sm:$0xff]
    %v60 = vld [vmem:[%s0 + $0x10] sm:$0xff]
    %v61 = vld [vmem:[%s0 + $0x18] sm:$0xff]
    %v62 = vld [vmem:[%s0 + $0x20] sm:$0xff]
    %v63 = vld [vmem:[%s0 + $0x28] sm:$0xff]
    %v64 = vld [vmem:[%s0 + $0x30] sm:$0xff]
    %v65 = vld [vmem:[%s0 + $0x38] sm:$0xff]
    %v66 = vld [vmem:[#allocation2] sm:$0xff]
    %v67 = vld [vmem:[#allocation2 + $0x8] sm:$0xff]
    %v68 = vld [vmem:[#allocation2 + $0x10] sm:$0xff]
    %v69 = vld [vmem:[#allocation2 + $0x18] sm:$0xff]
    %v70 = vld [vmem:[#allocation2 + $0x20] sm:$0xff]
    %v71 = vld [vmem:[#allocation2 + $0x28] sm:$0xff]
    %v72 = vld [vmem:[#allocation2 + $0x30] sm:$0xff]
    %v73 = vld [vmem:[#allocation2 + $0x38] sm:$0xff]
    %v74 = vld [vmem:[#allocation2 + $0x40] sm:$0xff]
    %v75 = vld [vmem:[#allocation2 + $0x48] sm:$0xff]
    %v76 = vld [vmem:[#allocation2 + $0x50] sm:$0xff]
    %v77 = vld [vmem:[#allocation2 + $0x58] sm:$0xff]
    %v78 = vld [vmem:[#allocation2 + $0x60] sm:$0xff]
    %v79 = vld [vmem:[#allocation2 + $0x68] sm:$0xff]
    %v80 = vld [vmem:[#allocation2 + $0x70] sm:$0xff]
    %v81 = vld [vmem:[#allocation2 + $0x78] sm:$0xff]
    %v82 = vld [vmem:[#allocation2 + $0x80] sm:$0xff]
    %v83 = vld [vmem:[#allocation2 + $0x88] sm:$0xff]
    %v84 = vld [vmem:[#allocation2 + $0x90] sm:$0xff]
    %v85 = vld [vmem:[#allocation2 + $0x98] sm:$0xff]
    %v86 = vld [vmem:[#allocation2 + $0xa0] sm:$0xff]
    %v87 = vld [vmem:[#allocation2 + $0xa8] sm:$0xff]
    %v88 = vld [vmem:[#allocation2 + $0xb0] sm:$0xff]
    %v89 = vld [vmem:[#allocation2 + $0xb8] sm:$0xff]
    %v90 = vld [vmem:[#allocation2 + $0xc0] sm:$0xff]
    %v91 = vld [vmem:[#allocation2 + $0xc8] sm:$0xff]
    %v92 = vld [vmem:[#allocation2 + $0xd0] sm:$0xff]
    %v93 = vld [vmem:[#allocation2 + $0xd8] sm:$0xff]
    %v94 = vld [vmem:[#allocation2 + $0xe0] sm:$0xff]
    %v95 = vld [vmem:[#allocation2 + $0xe8] sm:$0xff]
    %v96 = vld [vmem:[#allocation2 + $0xf0] sm:$0xff]
    %v97 = vld [vmem:[#allocation2 + $0xf8] sm:$0xff]
    %v98 = vld [vmem:[#allocation2 + $0x100] sm:$0xff]
    %v99 = vld [vmem:[#allocation2 + $0x108] sm:$0xff]
    %v100 = vld [vmem:[#allocation2 + $0x110] sm:$0xff]
    %v101 = vld [vmem:[#allocation2 + $0x118] sm:$0xff]
    %v102 = vld [vmem:[#allocation2 + $0x120] sm:$0xff]
    %v103 = vld [vmem:[#allocation2 + $0x128] sm:$0xff]
    %v104 = vld [vmem:[#allocation2 + $0x130] sm:$0xff]
    %v105 = vld [vmem:[#allocation2 + $0x138] sm:$0xff]
    %v106 = vld [vmem:[#allocation2 + $0x140] sm:$0xff]
    %v107 = vld [vmem:[#allocation2 + $0x148] sm:$0xff]
    %v108 = vld [vmem:[#allocation2 + $0x150] sm:$0xff]
    %v109 = vld [vmem:[#allocation2 + $0x158] sm:$0xff]
    %v110 = vld [vmem:[#allocation2 + $0x160] sm:$0xff]
    %v111 = vld [vmem:[#allocation2 + $0x168] sm:$0xff]
    %v112 = vld [vmem:[#allocation2 + $0x170] sm:$0xff]
    %v113 = vld [vmem:[#allocation2 + $0x178] sm:$0xff]
    %v114 = vld [vmem:[#allocation2 + $0x180] sm:$0xff]
    %v115 = vld [vmem:[#allocation2 + $0x188] sm:$0xff]
    %v116 = vld [vmem:[#allocation2 + $0x190] sm:$0xff]
    %v117 = vld [vmem:[#allocation2 + $0x198] sm:$0xff]
    %v118 = vld [vmem:[#allocation2 + $0x1a0] sm:$0xff]
    %v119 = vld [vmem:[#allocation2 + $0x1a8] sm:$0xff]
    %v120 = vld [vmem:[#allocation2 + $0x1b0] sm:$0xff]
    %v121 = vld [vmem:[#allocation2 + $0x1b8] sm:$0xff]
    %v122 = vld [vmem:[#allocation2 + $0x1c0] sm:$0xff]
    %v123 = vld [vmem:[#allocation2 + $0x1c8] sm:$0xff]
    %v124 = vld [vmem:[#allocation2 + $0x1d0] sm:$0xff]
    %v125 = vld [vmem:[#allocation2 + $0x1d8] sm:$0xff]
    %v126 = vld [vmem:[#allocation2 + $0x1e0] sm:$0xff]
    %v127 = vld [vmem:[#allocation2 + $0x1e8] sm:$0xff]
    %v128 = vld [vmem:[#allocation2 + $0x1f0] sm:$0xff]
    %v129 = vld [vmem:[#allocation2 + $0x1f8] sm:$0xff]
    %v130 = vld [vmem:[#allocation2 + $0x200] sm:$0xff]
    %v131 = vld [vmem:[#allocation2 + $0x208] sm:$0xff]
    %v132 = vld [vmem:[#allocation2 + $0x210] sm:$0xff]
    %v133 = vld [vmem:[#allocation2 + $0x218] sm:$0xff]
    %v134 = vld [vmem:[#allocation2 + $0x220] sm:$0xff]
    %v135 = vld [vmem:[#allocation2 + $0x228] sm:$0xff]
    %v136 = vld [vmem:[#allocation2 + $0x230] sm:$0xff]
    %v137 = vld [vmem:[#allocation2 + $0x238] sm:$0xff]
    %v138 = vld [vmem:[#allocation2 + $0x240] sm:$0xff]
    %v139 = vld [vmem:[#allocation2 + $0x248] sm:$0xff]
    %v140 = vld [vmem:[#allocation2 + $0x250] sm:$0xff]
    %v141 = vld [vmem:[#allocation2 + $0x258] sm:$0xff]
    %v142 = vld [vmem:[#allocation2 + $0x260] sm:$0xff]
    %v143 = vld [vmem:[#allocation2 + $0x268] sm:$0xff]
    %v144 = vld [vmem:[#allocation2 + $0x270] sm:$0xff]
    %v145 = vld [vmem:[#allocation2 + $0x278] sm:$0xff]
    %v146 = vld [vmem:[#allocation2 + $0x280] sm:$0xff]
    %v147 = vld [vmem:[#allocation2 + $0x288] sm:$0xff]
    %v148 = vld [vmem:[#allocation2 + $0x290] sm:$0xff]
    %v149 = vld [vmem:[#allocation2 + $0x298] sm:$0xff]
    %v150 = vld [vmem:[#allocation2 + $0x2a0] sm:$0xff]
    %v151 = vld [vmem:[#allocation2 + $0x2a8] sm:$0xff]
    %v152 = vld [vmem:[#allocation2 + $0x2b0] sm:$0xff]
    %v153 = vld [vmem:[#allocation2 + $0x2b8] sm:$0xff]
    %v154 = vld [vmem:[#allocation2 + $0x2c0] sm:$0xff]
    %v155 = vld [vmem:[#allocation2 + $0x2c8] sm:$0xff]
    %v156 = vld [vmem:[#allocation2 + $0x2d0] sm:$0xff]
    %v157 = vld [vmem:[#allocation2 + $0x2d8] sm:$0xff]
    %v158 = vld [vmem:[#allocation2 + $0x2e0] sm:$0xff]
    %v159 = vld [vmem:[#allocation2 + $0x2e8] sm:$0xff]
    %v160 = vld [vmem:[#allocation2 + $0x2f0] sm:$0xff]
    %v161 = vld [vmem:[#allocation2 + $0x2f8] sm:$0xff]
    %v162 = vld [vmem:[#allocation2 + $0x300] sm:$0xff]
    %v163 = vld [vmem:[#allocation2 + $0x308] sm:$0xff]
    %v164 = vld [vmem:[#allocation2 + $0x310] sm:$0xff]
    %v165 = vld [vmem:[#allocation2 + $0x318] sm:$0xff]
    %v166 = vld [vmem:[#allocation2 + $0x320] sm:$0xff]
    %v167 = vld [vmem:[#allocation2 + $0x328] sm:$0xff]
    %v168 = vld [vmem:[#allocation2 + $0x330] sm:$0xff]
    %v169 = vld [vmem:[#allocation2 + $0x338] sm:$0xff]
    %v170 = vld [vmem:[#allocation2 + $0x340] sm:$0xff]
    %v171 = vld [vmem:[#allocation2 + $0x348] sm:$0xff]
    %v172 = vld [vmem:[#allocation2 + $0x350] sm:$0xff]
    %v173 = vld [vmem:[#allocation2 + $0x358] sm:$0xff]
    %v174 = vld [vmem:[#allocation2 + $0x360] sm:$0xff]
    %v175 = vld [vmem:[#allocation2 + $0x368] sm:$0xff]
    %v176 = vld [vmem:[#allocation2 + $0x370] sm:$0xff]
    %v177 = vld [vmem:[#allocation2 + $0x378] sm:$0xff]
    %v178 = vld [vmem:[#allocation2 + $0x380] sm:$0xff]
    %v179 = vld [vmem:[#allocation2 + $0x388] sm:$0xff]
    %v180 = vld [vmem:[#allocation2 + $0x390] sm:$0xff]
    %v181 = vld [vmem:[#allocation2 + $0x398] sm:$0xff]
    %v182 = vld [vmem:[#allocation2 + $0x3a0] sm:$0xff]
    %v183 = vld [vmem:[#allocation2 + $0x3a8] sm:$0xff]
    %v184 = vld [vmem:[#allocation2 + $0x3b0] sm:$0xff]
    %v185 = vld [vmem:[#allocation2 + $0x3b8] sm:$0xff]
    %v186 = vld [vmem:[#allocation2 + $0x3c0] sm:$0xff]
    %v187 = vld [vmem:[#allocation2 + $0x3c8] sm:$0xff]
    %v188 = vld [vmem:[#allocation2 + $0x3d0] sm:$0xff]
    %v189 = vld [vmem:[#allocation2 + $0x3d8] sm:$0xff]
    %v190 = vld [vmem:[#allocation2 + $0x3e0] sm:$0xff]
    %v191 = vld [vmem:[#allocation2 + $0x3e8] sm:$0xff]
    %v192 = vld [vmem:[#allocation2 + $0x3f0] sm:$0xff]
    %v193 = vld [vmem:[#allocation2 + $0x3f8] sm:$0xff]
    %v194 = vld [vmem:[%s2] sm:$0x1]
    %v196 = vperm.slane %v194, 0
    %198 = vmatpush.msra.mxu0 %v81
    %199 = vmatpush.msra.mxu0 %v80
    %200 = vmatpush.msra.mxu0 %v79
    %201 = vmatpush.msra.mxu0 %v78
    %202 = vmatpush.msra.mxu0 %v77
    %203 = vmatpush.msra.mxu0 %v76
    %204 = vmatpush.msra.mxu0 %v75
    %205 = vmatpush.msra.mxu0 %v74
    %206 = vmatpush.msra.mxu0 %v73
    %207 = vmatpush.msra.mxu0 %v72
    %208 = vmatpush.msra.mxu0 %v71
    %209 = vmatpush.msra.mxu0 %v70
    %210 = vmatpush.msra.mxu0 %v69
    %211 = vmatpush.msra.mxu0 %v68
    %212 = vmatpush.msra.mxu0 %v67
    %213 = vmatpush.msra.mxu0 %v66
    %214 = vmatmul.f32.gmra.mxu0 %v58
    %v215 = vpop.f32.mrf.mxu0
    %v216 = vadd.f32 %v196, %v215
    %217 = vdwg.mxu0
    %218 = vmatpush.msra.mxu0 %v97
    %219 = vmatpush.msra.mxu0 %v96
    %220 = vmatpush.msra.mxu0 %v95
    %221 = vmatpush.msra.mxu0 %v94
    %222 = vmatpush.msra.mxu0 %v93
    %223 = vmatpush.msra.mxu0 %v92
    %224 = vmatpush.msra.mxu0 %v91
    %225 = vmatpush.msra.mxu0 %v90
    %226 = vmatpush.msra.mxu0 %v89
    %227 = vmatpush.msra.mxu0 %v88
    %228 = vmatpush.msra.mxu0 %v87
    %229 = vmatpush.msra.mxu0 %v86
    %230 = vmatpush.msra.mxu0 %v85
    %231 = vmatpush.msra.mxu0 %v84
    %232 = vmatpush.msra.mxu0 %v83
    %233 = vmatpush.msra.mxu0 %v82
    %234 = vmatmul.f32.gmra.mxu0 %v59
    %v235 = vpop.f32.mrf.mxu0
    %v236 = vadd.f32 %v216, %v235
    %237 = vdwg.mxu0
    %238 = vmatpush.msra.mxu0 %v113
    %239 = vmatpush.msra.mxu0 %v112
    %240 = vmatpush.msra.mxu0 %v111
    %241 = vmatpush.msra.mxu0 %v110
    %242 = vmatpush.msra.mxu0 %v109
    %243 = vmatpush.msra.mxu0 %v108
    %244 = vmatpush.msra.mxu0 %v107
    %245 = vmatpush.msra.mxu0 %v106
    %246 = vmatpush.msra.mxu0 %v105
    %247 = vmatpush.msra.mxu0 %v104
    %248 = vmatpush.msra.mxu0 %v103
    %249 = vmatpush.msra.mxu0 %v102
    %250 = vmatpush.msra.mxu0 %v101
    %251 = vmatpush.msra.mxu0 %v100
    %252 = vmatpush.msra.mxu0 %v99
    %253 = vmatpush.msra.mxu0 %v98
    %254 = vmatmul.f32.gmra.mxu0 %v60
    %v255 = vpop.f32.mrf.mxu0
    %v256 = vadd.f32 %v236, %v255
    %257 = vdwg.mxu0
    %258 = vmatpush.msra.mxu0 %v129
    %259 = vmatpush.msra.mxu0 %v128
    %260 = vmatpush.msra.mxu0 %v127
    %261 = vmatpush.msra.mxu0 %v126
    %262 = vmatpush.msra.mxu0 %v125
    %263 = vmatpush.msra.mxu0 %v124
    %264 = vmatpush.msra.mxu0 %v123
    %265 = vmatpush.msra.mxu0 %v122
    %266 = vmatpush.msra.mxu0 %v121
    %267 = vmatpush.msra.mxu0 %v120
    %268 = vmatpush.msra.mxu0 %v119
    %269 = vmatpush.msra.mxu0 %v118
    %270 = vmatpush.msra.mxu0 %v117
    %271 = vmatpush.msra.mxu0 %v116
    %272 = vmatpush.msra.mxu0 %v115
    %273 = vmatpush.msra.mxu0 %v114
    %274 = vmatmul.f32.gmra.mxu0 %v61
    %v275 = vpop.f32.mrf.mxu0
    %v276 = vadd.f32 %v256, %v275
    %277 = vdwg.mxu0
    %278 = vmatpush.msra.mxu0 %v145
    %279 = vmatpush.msra.mxu0 %v144
    %280 = vmatpush.msra.mxu0 %v143
    %281 = vmatpush.msra.mxu0 %v142
    %282 = vmatpush.msra.mxu0 %v141
    %283 = vmatpush.msra.mxu0 %v140
    %284 = vmatpush.msra.mxu0 %v139
    %285 = vmatpush.msra.mxu0 %v138
    %286 = vmatpush.msra.mxu0 %v137
    %287 = vmatpush.msra.mxu0 %v136
    %288 = vmatpush.msra.mxu0 %v135
    %289 = vmatpush.msra.mxu0 %v134
    %290 = vmatpush.msra.mxu0 %v133
    %291 = vmatpush.msra.mxu0 %v132
    %292 = vmatpush.msra.mxu0 %v131
    %293 = vmatpush.msra.mxu0 %v130
    %294 = vmatmul.f32.gmra.mxu0 %v62
    %v295 = vpop.f32.mrf.mxu0
    %v296 = vadd.f32 %v276, %v295
    %297 = vdwg.mxu0
    %298 = vmatpush.msra.mxu0 %v161
    %299 = vmatpush.msra.mxu0 %v160
    %300 = vmatpush.msra.mxu0 %v159
    %301 = vmatpush.msra.mxu0 %v158
    %302 = vmatpush.msra.mxu0 %v157
    %303 = vmatpush.msra.mxu0 %v156
    %304 = vmatpush.msra.mxu0 %v155
    %305 = vmatpush.msra.mxu0 %v154
    %306 = vmatpush.msra.mxu0 %v153
    %307 = vmatpush.msra.mxu0 %v152
    %308 = vmatpush.msra.mxu0 %v151
    %309 = vmatpush.msra.mxu0 %v150
    %310 = vmatpush.msra.mxu0 %v149
    %311 = vmatpush.msra.mxu0 %v148
    %312 = vmatpush.msra.mxu0 %v147
    %313 = vmatpush.msra.mxu0 %v146
    %314 = vmatmul.f32.gmra.mxu0 %v63
    %v315 = vpop.f32.mrf.mxu0
    %v316 = vadd.f32 %v296, %v315
    %317 = vdwg.mxu0
    %318 = vmatpush.msra.mxu0 %v177
    %319 = vmatpush.msra.mxu0 %v176
    %320 = vmatpush.msra.mxu0 %v175
    %321 = vmatpush.msra.mxu0 %v174
    %322 = vmatpush.msra.mxu0 %v173
    %323 = vmatpush.msra.mxu0 %v172
    %324 = vmatpush.msra.mxu0 %v171
    %325 = vmatpush.msra.mxu0 %v170
    %326 = vmatpush.msra.mxu0 %v169
    %327 = vmatpush.msra.mxu0 %v168
    %328 = vmatpush.msra.mxu0 %v167
    %329 = vmatpush.msra.mxu0 %v166
    %330 = vmatpush.msra.mxu0 %v165
    %331 = vmatpush.msra.mxu0 %v164
    %332 = vmatpush.msra.mxu0 %v163
    %333 = vmatpush.msra.mxu0 %v162
    %334 = vmatmul.f32.gmra.mxu0 %v64
    %v335 = vpop.f32.mrf.mxu0
    %v336 = vadd.f32 %v316, %v335
    %337 = vdwg.mxu0
    %338 = vmatpush.msra.mxu0 %v193
    %339 = vmatpush.msra.mxu0 %v192
    %340 = vmatpush.msra.mxu0 %v191
    %341 = vmatpush.msra.mxu0 %v190
    %342 = vmatpush.msra.mxu0 %v189
    %343 = vmatpush.msra.mxu0 %v188
    %344 = vmatpush.msra.mxu0 %v187
    %345 = vmatpush.msra.mxu0 %v186
    %346 = vmatpush.msra.mxu0 %v185
    %347 = vmatpush.msra.mxu0 %v184
    %348 = vmatpush.msra.mxu0 %v183
    %349 = vmatpush.msra.mxu0 %v182
    %350 = vmatpush.msra.mxu0 %v181
    %351 = vmatpush.msra.mxu0 %v180
    %352 = vmatpush.msra.mxu0 %v179
    %353 = vmatpush.msra.mxu0 %v178
    %354 = vmatmul.f32.gmra.mxu0 %v65
    %v355 = vpop.f32.mrf.mxu0
    %v356 = vadd.f32 %v336, %v355
    %357 = vdwg.mxu0
    %v358 = vmax.f32 %v356, 0.0
    %v359 = vld [vmem:[%s3] sm:$0xff]
    %v360 = vld [vmem:[%s3 + $0x8] sm:$0xff]
    %v361 = vld [vmem:[%s3 + $0x10] sm:$0xff]
    %v362 = vld [vmem:[%s3 + $0x18] sm:$0xff]
    %v363 = vld [vmem:[%s3 + $0x20] sm:$0xff]
    %v364 = vld [vmem:[%s3 + $0x28] sm:$0xff]
    %v365 = vld [vmem:[%s3 + $0x30] sm:$0xff]
    %v366 = vld [vmem:[%s3 + $0x38] sm:$0xff]
    %v367 = vld [vmem:[%s3 + $0x40] sm:$0xff]
    %v368 = vld [vmem:[%s3 + $0x48] sm:$0xff]
    %v369 = vld [vmem:[%s3 + $0x50] sm:$0xff]
    %v370 = vld [vmem:[%s3 + $0x58] sm:$0xff]
    %v371 = vld [vmem:[%s3 + $0x60] sm:$0xff]
    %v372 = vld [vmem:[%s3 + $0x68] sm:$0xff]
    %v373 = vld [vmem:[%s3 + $0x70] sm:$0xff]
    %v374 = vld [vmem:[%s3 + $0x78] sm:$0xff]
    %v375 = vld [vmem:[%s4] sm:$0x1]
    %v377 = vperm.slane %v375, 0
    %379 = vmatpush.msra.mxu0 %v374
    %380 = vmatpush.msra.mxu0 %v373
    %381 = vmatpush.msra.mxu0 %v372
    %382 = vmatpush.msra.mxu0 %v371
    %383 = vmatpush.msra.mxu0 %v370
    %384 = vmatpush.msra.mxu0 %v369
    %385 = vmatpush.msra.mxu0 %v368
    %386 = vmatpush.msra.mxu0 %v367
    %387 = vmatpush.msra.mxu0 %v366
    %388 = vmatpush.msra.mxu0 %v365
    %389 = vmatpush.msra.mxu0 %v364
    %390 = vmatpush.msra.mxu0 %v363
    %391 = vmatpush.msra.mxu0 %v362
    %392 = vmatpush.msra.mxu0 %v361
    %393 = vmatpush.msra.mxu0 %v360
    %394 = vmatpush.msra.mxu0 %v359
    %395 = vmatmul.f32.gmra.mxu0 %v358
    %v396 = vpop.f32.mrf.mxu0
    %v397 = vadd.f32 %v377, %v396
    %398 = vdwg.mxu0
    %v399 = vmax.f32 %v397, 0.0
    %v400 = vld [vmem:[#allocation4] sm:$0xff]
    %v401 = vld [vmem:[#allocation4 + $0x8] sm:$0xff]
    %v402 = vld [vmem:[#allocation4 + $0x10] sm:$0xff]
    %v403 = vld [vmem:[#allocation4 + $0x18] sm:$0xff]
    %v404 = vld [vmem:[#allocation4 + $0x20] sm:$0xff]
    %v405 = vld [vmem:[#allocation4 + $0x28] sm:$0xff]
    %v406 = vld [vmem:[#allocation4 + $0x30] sm:$0xff]
    %v407 = vld [vmem:[#allocation4 + $0x38] sm:$0xff]
    %v408 = vld [vmem:[#allocation4 + $0x40] sm:$0xff]
    %v409 = vld [vmem:[#allocation4 + $0x48] sm:$0xff]
    %v410 = vld [vmem:[#allocation4 + $0x50] sm:$0xff]
    %v411 = vld [vmem:[#allocation4 + $0x58] sm:$0xff]
    %v412 = vld [vmem:[#allocation4 + $0x60] sm:$0xff]
    %v413 = vld [vmem:[#allocation4 + $0x68] sm:$0xff]
    %v414 = vld [vmem:[#allocation4 + $0x70] sm:$0xff]
    %v415 = vld [vmem:[#allocation4 + $0x78] sm:$0xff]
    %v416 = vld [vmem:[%s6] sm:$0x1]
    %v418 = vperm.slane %v416, 0
    %420 = vmatpush.msra.mxu0 %v415
    %421 = vmatpush.msra.mxu0 %v414
    %422 = vmatpush.msra.mxu0 %v413
    %423 = vmatpush.msra.mxu0 %v412
    %424 = vmatpush.msra.mxu0 %v411
    %425 = vmatpush.msra.mxu0 %v410
    %426 = vmatpush.msra.mxu0 %v409
    %427 = vmatpush.msra.mxu0 %v408
    %428 = vmatpush.msra.mxu0 %v407
    %429 = vmatpush.msra.mxu0 %v406
    %430 = vmatpush.msra.mxu0 %v405
    %431 = vmatpush.msra.mxu0 %v404
    %432 = vmatpush.msra.mxu0 %v403
    %433 = vmatpush.msra.mxu0 %v402
    %434 = vmatpush.msra.mxu0 %v401
    %435 = vmatpush.msra.mxu0 %v400
    %436 = vmatmul.f32.gmra.mxu0 %v399
    %v437 = vpop.f32.mrf.mxu0
    %v438 = vadd.f32 %v418, %v437
    %439 = vdwg.mxu0
    %440 = vst [vmem:[%s7] sm:$0xff] %v438
    // Predicated region
    $region38: #{mlp_forward.1} parent=1 // pred_check
      _
    $region39: #{mlp_forward.1} parent=1 // pred_check_branch
      %442 = sbr.rel (0) target = $region41
    $region40: #{mlp_forward.1} parent=1 // pred_region
      _
    $region41: #{mlp_forward.1} parent=1 // pred_fallthru
      _
    // Predicated region
    $region42: #{mlp_forward.1} parent=1 // pred_check
      _
    $region43: #{mlp_forward.1} parent=1 // pred_check_branch
      %444 = sbr.rel (0) target = $region45
    $region44: #{mlp_forward.1} parent=1 // pred_region
      _
    $region45: #{mlp_forward.1} parent=1 // pred_fallthru
      _
    %445 = vsyncpa [#allocation3], 1
    %446 = vsyncpa [#allocation5], 1

</llo_original>
